<compile_context>
chip_gen: v5e
topology: v5e:2x2
jax: 0.10.0
libtpu: 0.0.40
codegen_flags: <defaults>
</compile_context>

<pallas_src>
import jax
import jax.numpy as jnp
import numpy as np
from jax.experimental import pallas as pl
from jax.experimental.pallas import tpu as pltpu

D = 128  # SS hidden size (fixed by the module: Linear(128, 128))


def ss_kernel(x_ref, w_ref, bsp_ref, bsh_ref, osp_ref, osh_ref):
    # x_ref : (tm, 128) f32      w_ref : (128, 256) bf16
    # bsp/bsh : (1, 128) f32     osp/osh : (tm, 128) f32
    x = x_ref[...].astype(jnp.bfloat16)                 # cast rides idle VALU slots
    acc = jnp.dot(x, w_ref[...],
                  preferred_element_type=jnp.float32)   # (tm, 256) f32, single MXU pass
    # 128-lane split lands exactly on a vreg lane-group boundary: no relayout,
    # both stores remain unmasked lane-dense vst.
    osp_ref[...] = acc[:, :D] + bsp_ref[...]
    osh_ref[...] = acc[:, D:] + bsh_ref[...]


def _round_up(n, m):
    return ((n + m - 1) // m) * m


def _choose_tm(B):
    # Big tiles amortize the ~0.35 us per-grid-step overhead (512-1024 rows
    # hit ~85% of HBM roofline vs ~63% at 256).  For larger B, split into at
    # least 2 tiles so the "parallel" axis shards rows across both v7x
    # TensorCores.  VMEM stays tiny (<3 MiB double-buffered at tm=1024).
    if B <= 256:
        return max(16, _round_up(B, 16))
    return min(1024, _round_up(-(-B // 2), 16))


def prepare_params(w_sp, b_sp, w_sh, b_sh):
    """One-time weight prep (hoisted out of the per-call path).

    Fuses the two linears: x @ [W_sp^T | W_sh^T], biases kept separate so the
    kernel can write two lane-dense (B, 128) outputs directly.
    """
    w_cat = jnp.concatenate([w_sp.T, w_sh.T], axis=1).astype(jnp.bfloat16)  # (128, 256)
    b_sp2 = b_sp.reshape(1, D).astype(jnp.float32)
    b_sh2 = b_sh.reshape(1, D).astype(jnp.float32)
    return w_cat, b_sp2, b_sh2


@jax.jit
def ss_forward(i, w_cat, b_sp2, b_sh2):
    """SS.forward with t=None.

    i      : (B, 128) float32 input features
    w_cat  : (128, 256) bf16 fused [W_sp^T | W_sh^T]  (from prepare_params)
    b_sp2  : (1, 128) f32
    b_sh2  : (1, 128) f32
    returns (i_sp, i_sh), each (B, 128) float32.
    """
    B, d = i.shape
    assert d == D

    tm = _choose_tm(B)
    grid = (-(-B // tm),)  # cdiv; ragged last tile is masked by Pallas

    i_sp, i_sh = pl.pallas_call(
        ss_kernel,
        grid=grid,
        in_specs=[
            pl.BlockSpec((tm, D), lambda m: (m, 0)),        # row tile of x (f32)
            pl.BlockSpec((D, 2 * D), lambda m: (0, 0)),     # fused weights (resident)
            pl.BlockSpec((1, D), lambda m: (0, 0)),         # bias sp (resident)
            pl.BlockSpec((1, D), lambda m: (0, 0)),         # bias sh (resident)
        ],
        out_specs=[
            pl.BlockSpec((tm, D), lambda m: (m, 0)),
            pl.BlockSpec((tm, D), lambda m: (m, 0)),
        ],
        out_shape=[
            jax.ShapeDtypeStruct((B, D), jnp.float32),
            jax.ShapeDtypeStruct((B, D), jnp.float32),
        ],
        compiler_params=pltpu.CompilerParams(
            dimension_semantics=("parallel",)),
    )(i, w_cat, b_sp2, b_sh2)

    return i_sp, i_sh


def init_params(key):
    """PyTorch nn.Linear default init (uniform(-1/sqrt(in), 1/sqrt(in)))."""
    ks = jax.random.split(key, 4)
    bound = 1.0 / (D ** 0.5)
    w_sp = jax.random.uniform(ks[0], (D, D), jnp.float32, -bound, bound)
    b_sp = jax.random.uniform(ks[1], (D,), jnp.float32, -bound, bound)
    w_sh = jax.random.uniform(ks[2], (D, D), jnp.float32, -bound, bound)
    b_sh = jax.random.uniform(ks[3], (D,), jnp.float32, -bound, bound)
    return w_sp, b_sp, w_sh, b_sh


if __name__ == "__main__":
    key = jax.random.PRNGKey(0)
    k_i, k_p = jax.random.split(key)

    B = 2
    i = jax.random.normal(k_i, (B, D), jnp.float32)
    w_sp, b_sp, w_sh, b_sh = init_params(k_p)

    # One-time weight prep (would be cached by the caller across forwards).
    w_cat, b_sp2, b_sh2 = prepare_params(w_sp, b_sp, w_sh, b_sh)
    jax.block_until_ready((w_cat, b_sp2, b_sh2))

    i_sp, i_sh = ss_forward(i, w_cat, b_sp2, b_sh2)
    jax.block_until_ready((i_sp, i_sh))

    # Reference (same bf16 operand precision, f32 accumulation + f32 bias).
    x_bf = i.astype(jnp.bfloat16)
    ref_sp = jnp.dot(x_bf, w_sp.T.astype(jnp.bfloat16),
                     preferred_element_type=jnp.float32) + b_sp
    ref_sh = jnp.dot(x_bf, w_sh.T.astype(jnp.bfloat16),
                     preferred_element_type=jnp.float32) + b_sh
    np.testing.assert_allclose(np.asarray(i_sp), np.asarray(ref_sp), rtol=1e-2, atol=1e-2)
    np.testing.assert_allclose(np.asarray(i_sh), np.asarray(ref_sh), rtol=1e-2, atol=1e-2)

    assert i_sp.shape == (B, D) and i_sh.shape == (B, D)
    assert i_sp.dtype == jnp.float32 and i_sh.dtype == jnp.float32
    print("KERNEL_OK")
</pallas_src>

<mosaic_0001>
module attributes {stable_mosaic.version = 11 : i64} {
  func.func @ss_kernel(%arg0: i32, %arg1: memref<16x128xf32, #tpu.memory_space<vmem>>, %arg2: memref<128x256xbf16, #tpu.memory_space<vmem>>, %arg3: memref<1x128xf32, #tpu.memory_space<vmem>>, %arg4: memref<1x128xf32, #tpu.memory_space<vmem>>, %arg5: memref<16x128xf32, #tpu.memory_space<vmem>>, %arg6: memref<16x128xf32, #tpu.memory_space<vmem>>) attributes {dimension_semantics = [#tpu.dimension_semantics<parallel>], iteration_bounds = array<i64: 1>, scalar_prefetch = 0 : i64, scratch_operands = 0 : i64, tpu.core_type = #tpu.core_type<tc>, window_params = [{transform_indices = @transform_0, window_bounds = array<i64: 16, 128>}, {pipeline_mode = #tpu.pipeline_mode<synchronous>, transform_indices = @transform_1, window_bounds = array<i64: 128, 256>}, {pipeline_mode = #tpu.pipeline_mode<synchronous>, transform_indices = @transform_2, window_bounds = array<i64: 1, 128>}, {pipeline_mode = #tpu.pipeline_mode<synchronous>, transform_indices = @transform_3, window_bounds = array<i64: 1, 128>}, {transform_indices = @transform_4, window_bounds = array<i64: 16, 128>}, {transform_indices = @transform_5, window_bounds = array<i64: 16, 128>}]} {
    %c0 = arith.constant 0 : index
    %c0_0 = arith.constant 0 : index
    %0 = vector.load %arg1[%c0, %c0_0] : memref<16x128xf32, #tpu.memory_space<vmem>>, vector<16x128xf32>
    %1 = arith.truncf %0 : vector<16x128xf32> to vector<16x128xbf16>
    %c0_1 = arith.constant 0 : index
    %c0_2 = arith.constant 0 : index
    %2 = vector.load %arg2[%c0_1, %c0_2] : memref<128x256xbf16, #tpu.memory_space<vmem>>, vector<128x256xbf16>
    %cst = arith.constant dense<0.000000e+00> : vector<16x256xf32>
    %3 = tpu.matmul %1, %2, %cst {dimension_numbers = #tpu.dot_dimension_numbers<[1], [0], [0], [1], [0, 0, 1, 1], [], []>} : vector<16x128xbf16>, vector<128x256xbf16>, vector<16x256xf32> -> vector<16x256xf32>
    %4 = vector.extract_strided_slice %3 {offsets = [0, 0], sizes = [16, 128], strides = [1, 1]} : vector<16x256xf32> to vector<16x128xf32>
    %c0_3 = arith.constant 0 : index
    %c0_4 = arith.constant 0 : index
    %5 = vector.load %arg3[%c0_3, %c0_4] : memref<1x128xf32, #tpu.memory_space<vmem>>, vector<1x128xf32>
    %6 = vector.broadcast %5 : vector<1x128xf32> to vector<16x128xf32>
    %7 = arith.addf %4, %6 : vector<16x128xf32>
    %c0_5 = arith.constant 0 : index
    %c0_6 = arith.constant 0 : index
    %8 = vector.load %arg5[%c0_5, %c0_6] : memref<16x128xf32, #tpu.memory_space<vmem>>, vector<16x128xf32>
    tpu.vector_store %arg5[%c0_5, %c0_6], %7 {strides = array<i32>} : memref<16x128xf32, #tpu.memory_space<vmem>>, vector<16x128xf32>,
    %9 = vector.extract_strided_slice %3 {offsets = [0, 128], sizes = [16, 128], strides = [1, 1]} : vector<16x256xf32> to vector<16x128xf32>
    %c0_7 = arith.constant 0 : index
    %c0_8 = arith.constant 0 : index
    %10 = vector.load %arg4[%c0_7, %c0_8] : memref<1x128xf32, #tpu.memory_space<vmem>>, vector<1x128xf32>
    %11 = vector.broadcast %10 : vector<1x128xf32> to vector<16x128xf32>
    %12 = arith.addf %9, %11 : vector<16x128xf32>
    %c0_9 = arith.constant 0 : index
    %c0_10 = arith.constant 0 : index
    %13 = vector.load %arg6[%c0_9, %c0_10] : memref<16x128xf32, #tpu.memory_space<vmem>>, vector<16x128xf32>
    tpu.vector_store %arg6[%c0_9, %c0_10], %12 {strides = array<i32>} : memref<16x128xf32, #tpu.memory_space<vmem>>, vector<16x128xf32>,
    return
  }
  func.func @transform_0(%arg0: i32) -> (i32, i32) {
    %c0_i32 = arith.constant 0 : i32
    %c0_i32_0 = arith.constant 0 : i32
    return %arg0, %c0_i32 : i32, i32
  }
  func.func @transform_1(%arg0: i32) -> (i32, i32) {
    %c0_i32 = arith.constant 0 : i32
    %c0_i32_0 = arith.constant 0 : i32
    %c0_i32_1 = arith.constant 0 : i32
    return %c0_i32, %c0_i32_0 : i32, i32
  }
  func.func @transform_2(%arg0: i32) -> (i32, i32) {
    %c0_i32 = arith.constant 0 : i32
    %c0_i32_0 = arith.constant 0 : i32
    %c0_i32_1 = arith.constant 0 : i32
    return %c0_i32, %c0_i32_0 : i32, i32
  }
  func.func @transform_3(%arg0: i32) -> (i32, i32) {
    %c0_i32 = arith.constant 0 : i32
    %c0_i32_0 = arith.constant 0 : i32
    %c0_i32_1 = arith.constant 0 : i32
    return %c0_i32, %c0_i32_0 : i32, i32
  }
  func.func @transform_4(%arg0: i32) -> (i32, i32) {
    %c0_i32 = arith.constant 0 : i32
    %c0_i32_0 = arith.constant 0 : i32
    return %arg0, %c0_i32 : i32, i32
  }
  func.func @transform_5(%arg0: i32) -> (i32, i32) {
    %c0_i32 = arith.constant 0 : i32
    %c0_i32_0 = arith.constant 0 : i32
    return %arg0, %c0_i32 : i32, i32
  }
}

</mosaic_0001>

<llo_original>
// kernel: ss_forward.1
$region0: #{ss_forward.1}
  #allocation0 [shape = 'u32[]', space=smem, size = 0x4, offset = 0x4, fixed_abs, tag = 'smem constant byte address 0x4 - core index']
  #allocation1 [shape = 'u32[72,128]{1,0:T(1,128)}', space=vmem, size = 0x9000, scoped, tag = 'internal scratch']
  %s0 = inlined_call_operand.hbm [shape: f32[2,128], index: 0, kind: input, shape index: {}]
  %s1 = inlined_call_operand.hbm [shape: bf16[128,256], index: 1, kind: input, shape index: {}]
  %s2 = inlined_call_operand.vmem [shape: f32[1,128], index: 2, kind: input, shape index: {}]
  %s3 = inlined_call_operand.vmem [shape: f32[1,128], index: 3, kind: input, shape index: {}]
  %s4 = inlined_call_operand.hbm [shape: f32[2,128], index: 4, kind: output, shape index: {0}]
  %s5 = inlined_call_operand.hbm [shape: f32[2,128], index: 5, kind: output, shape index: {1}]
  %6 = xla_tuple %s4, %s5
  %s7 = sld [smem:[#allocation0]]
  $region42: #{ss_forward.1} parent=0
    _
  %s9 = ssub.s32 1, %s7
  %s10 = scalar_select 0, %s9, %s7
  $region1: #{ss_forward.1} parent=0
    #allocation2 [shape = 'u8[8192]{0}', space=vmem, size = 0x2000, scoped, tag = 'input window, operand 0, single buffered']
    #allocation3 [shape = 's32[1]{0}', space=sflag, size = 0x4, scoped, tag = 'scoped memory for ss_forward.1']
    #allocation4 [shape = 's32[1]{0}', space=sflag, size = 0x4, scoped, tag = 'scoped memory for ss_forward.1']
    #allocation5 [shape = 'u8[65536]{0}', space=vmem, size = 0x10000, scoped, tag = 'input window, operand 1, single buffered']
    #allocation6 [shape = 's32[1]{0}', space=sflag, size = 0x4, scoped, tag = 'scoped memory for ss_forward.1']
    #allocation7 [shape = 'u8[8192]{0}', space=vmem, size = 0x2000, scoped, tag = 'output window, operand 0, single buffered']
    #allocation8 [shape = 'u8[8192]{0}', space=vmem, size = 0x2000, scoped, tag = 'output window, operand 1, single buffered']
    #allocation9 [shape = 's32[1]{0}', space=sflag, size = 0x4, scoped, tag = 'scoped memory for ss_forward.1']
    %11 = vsyncpa [#allocation3], 0
    %12 = vsyncpa [#allocation6], 0
    %13 = vsyncpa [#allocation4], 0
    %14 = vsyncpa [#allocation9], 0
    // Predicated region
    $region2: #{ss_forward.1} parent=1 // pred_check
      _
    $region3: #{ss_forward.1} parent=1 // pred_check_branch
      %16 = sbr.rel (0) target = $region5
    $region4: #{ss_forward.1} parent=1 // pred_region
      %18 = vsyncadd [#allocation3], 224
      %s19 = sshll.u32 %s0, 4
      %s20 = int_to_ptr.hbm [resolvable:$true] %s19
      %s21 = sshll.u32 [#allocation2], 4
      %s22 = int_to_ptr.vmem [resolvable:$true] %s21
      %27 = dma.hbm_to_vmem [thread:$0]  %s20, 32, %s22, [#allocation3], 32, 32, 2
    $region5: #{ss_forward.1} parent=1 // pred_fallthru
      _
    // Predicated region
    $region6: #{ss_forward.1} parent=1 // pred_check
      _
    $region7: #{ss_forward.1} parent=1 // pred_check_branch
      %29 = sbr.rel (0) target = $region9
    $region8: #{ss_forward.1} parent=1 // pred_region
      %31 = vsyncadd [#allocation6], 0
      %s32 = sshll.u32 %s1, 4
      %s33 = int_to_ptr.hbm [resolvable:$true] %s32
      %s34 = sshll.u32 [#allocation5], 4
      %s35 = int_to_ptr.vmem [resolvable:$true] %s34
      %40 = dma.hbm_to_vmem [thread:$0]  %s33, 2048, %s35, [#allocation6], 128, 128, 8
    $region9: #{ss_forward.1} parent=1 // pred_fallthru
      _
    // Predicated region
    $region10: #{ss_forward.1} parent=1 // pred_check
      _
    $region11: #{ss_forward.1} parent=1 // pred_check_branch
      %42 = sbr.rel (0) target = $region13
    $region12: #{ss_forward.1} parent=1 // pred_region
      _
    $region13: #{ss_forward.1} parent=1 // pred_fallthru
      _
    // Predicated region
    $region14: #{ss_forward.1} parent=1 // pred_check
      _
    $region15: #{ss_forward.1} parent=1 // pred_check_branch
      %44 = sbr.rel (0) target = $region17
    $region16: #{ss_forward.1} parent=1 // pred_region
      _
    $region17: #{ss_forward.1} parent=1 // pred_fallthru
      _
    // Predicated region
    $region18: #{ss_forward.1} parent=1 // pred_check
      _
    $region19: #{ss_forward.1} parent=1 // pred_check_branch
      %46 = sbr.rel (0) target = $region21
    $region20: #{ss_forward.1} parent=1 // pred_region
      %48 = dma.done [#allocation3], 256
    $region21: #{ss_forward.1} parent=1 // pred_fallthru
      _
    // Predicated region
    $region22: #{ss_forward.1} parent=1 // pred_check
      _
    $region23: #{ss_forward.1} parent=1 // pred_check_branch
      %50 = sbr.rel (0) target = $region25
    $region24: #{ss_forward.1} parent=1 // pred_region
      %52 = dma.done [#allocation6], 2048
    $region25: #{ss_forward.1} parent=1 // pred_fallthru
      _
    %v53 = vld [vmem:[#allocation2] sm:$0xff]
    %v54 = vld [vmem:[#allocation2 + $0x8] sm:$0xff]
    %v55 = vpack.c.bf16 %v54, %v53
    %v56 = vld [vmem:[#allocation5] sm:$0xff]
    %v57 = vld [vmem:[#allocation5 + $0x8] sm:$0xff]
    %v58 = vld [vmem:[#allocation5 + $0x10] sm:$0xff]
    %v59 = vld [vmem:[#allocation5 + $0x18] sm:$0xff]
    %v60 = vld [vmem:[#allocation5 + $0x20] sm:$0xff]
    %v61 = vld [vmem:[#allocation5 + $0x28] sm:$0xff]
    %v62 = vld [vmem:[#allocation5 + $0x30] sm:$0xff]
    %v63 = vld [vmem:[#allocation5 + $0x38] sm:$0xff]
    %v64 = vld [vmem:[#allocation5 + $0x40] sm:$0xff]
    %v65 = vld [vmem:[#allocation5 + $0x48] sm:$0xff]
    %v66 = vld [vmem:[#allocation5 + $0x50] sm:$0xff]
    %v67 = vld [vmem:[#allocation5 + $0x58] sm:$0xff]
    %v68 = vld [vmem:[#allocation5 + $0x60] sm:$0xff]
    %v69 = vld [vmem:[#allocation5 + $0x68] sm:$0xff]
    %v70 = vld [vmem:[#allocation5 + $0x70] sm:$0xff]
    %v71 = vld [vmem:[#allocation5 + $0x78] sm:$0xff]
    %v88 = vunpack.c.l.b16 %v56
    %v89 = vunpack.c.h.b16 %v56
    %v90 = vunpack.c.l.b16 %v57
    %v91 = vunpack.c.h.b16 %v57
    %v92 = vunpack.c.l.b16 %v58
    %v93 = vunpack.c.h.b16 %v58
    %v94 = vunpack.c.l.b16 %v59
    %v95 = vunpack.c.h.b16 %v59
    %v96 = vunpack.c.l.b16 %v60
    %v97 = vunpack.c.h.b16 %v60
    %v98 = vunpack.c.l.b16 %v61
    %v99 = vunpack.c.h.b16 %v61
    %v100 = vunpack.c.l.b16 %v62
    %v101 = vunpack.c.h.b16 %v62
    %v102 = vunpack.c.l.b16 %v63
    %v103 = vunpack.c.h.b16 %v63
    %v104 = vunpack.c.l.b16 %v64
    %v105 = vunpack.c.h.b16 %v64
    %v106 = vunpack.c.l.b16 %v65
    %v107 = vunpack.c.h.b16 %v65
    %v108 = vunpack.c.l.b16 %v66
    %v109 = vunpack.c.h.b16 %v66
    %v110 = vunpack.c.l.b16 %v67
    %v111 = vunpack.c.h.b16 %v67
    %v112 = vunpack.c.l.b16 %v68
    %v113 = vunpack.c.h.b16 %v68
    %v114 = vunpack.c.l.b16 %v69
    %v115 = vunpack.c.h.b16 %v69
    %v116 = vunpack.c.l.b16 %v70
    %v117 = vunpack.c.h.b16 %v70
    %v118 = vunpack.c.l.b16 %v71
    %v119 = vunpack.c.h.b16 %v71
    %v120 = vpack.c.b16 %v90, %v88
    %v121 = vpack.c.b16 %v91, %v89
    %v122 = vpack.c.b16 %v94, %v92
    %v123 = vpack.c.b16 %v95, %v93
    %v124 = vpack.c.b16 %v98, %v96
    %v125 = vpack.c.b16 %v99, %v97
    %v126 = vpack.c.b16 %v102, %v100
    %v127 = vpack.c.b16 %v103, %v101
    %v128 = vpack.c.b16 %v106, %v104
    %v129 = vpack.c.b16 %v107, %v105
    %v130 = vpack.c.b16 %v110, %v108
    %v131 = vpack.c.b16 %v111, %v109
    %v132 = vpack.c.b16 %v114, %v112
    %v133 = vpack.c.b16 %v115, %v113
    %v134 = vpack.c.b16 %v118, %v116
    %v135 = vpack.c.b16 %v119, %v117
    %152 = vmatpush.bf16.msra.mxu0 %v134
    %153 = vmatpush.bf16.msra.mxu0 %v132
    %154 = vmatpush.bf16.msra.mxu0 %v130
    %155 = vmatpush.bf16.msra.mxu0 %v128
    %156 = vmatpush.bf16.msra.mxu0 %v126
    %157 = vmatpush.bf16.msra.mxu0 %v124
    %158 = vmatpush.bf16.msra.mxu0 %v122
    %159 = vmatpush.bf16.msra.mxu0 %v120
    %160 = vmatmul.bf16.gmra.mxu0 %v55
    %v161 = vpop.f32.mrf.mxu0
    %v162 = vadd.f32 0.0, %v161
    %v163 = vpop.f32.mrf.mxu0
    %v164 = vadd.f32 0.0, %v163
    %165 = vdwg.mxu0
    %166 = vmatpush.bf16.msra.mxu0 %v135
    %167 = vmatpush.bf16.msra.mxu0 %v133
    %168 = vmatpush.bf16.msra.mxu0 %v131
    %169 = vmatpush.bf16.msra.mxu0 %v129
    %170 = vmatpush.bf16.msra.mxu0 %v127
    %171 = vmatpush.bf16.msra.mxu0 %v125
    %172 = vmatpush.bf16.msra.mxu0 %v123
    %173 = vmatpush.bf16.msra.mxu0 %v121
    %174 = vmatmul.bf16.gmra.mxu0 %v55
    %v175 = vpop.f32.mrf.mxu0
    %v176 = vadd.f32 0.0, %v175
    %v177 = vpop.f32.mrf.mxu0
    %v178 = vadd.f32 0.0, %v177
    %179 = vdwg.mxu0
    %v180 = vld [vmem:[%s2] sm:$0x1]
    %v182 = vperm.slane %v180, 0
    %v184 = vadd.f32 %v162, %v182
    %v185 = vadd.f32 %v164, %v182
    %186 = vst [vmem:[#allocation7] sm:$0xff] %v184
    %187 = vst [vmem:[#allocation7 + $0x8] sm:$0xff] %v185
    %v188 = vld [vmem:[%s3] sm:$0x1]
    %v190 = vperm.slane %v188, 0
    %v192 = vadd.f32 %v176, %v190
    %v193 = vadd.f32 %v178, %v190
    %194 = vst [vmem:[#allocation8] sm:$0xff] %v192
    %195 = vst [vmem:[#allocation8 + $0x8] sm:$0xff] %v193
    // Predicated region
    $region26: #{ss_forward.1} parent=1 // pred_check
      _
    $region27: #{ss_forward.1} parent=1 // pred_check_branch
      %197 = sbr.rel (0) target = $region29
    $region28: #{ss_forward.1} parent=1 // pred_region
      %199 = vsyncadd [#allocation4], 224
      %s200 = sshll.u32 [#allocation7], 4
      %s201 = int_to_ptr.vmem [resolvable:$true] %s200
      %s202 = sshll.u32 %s4, 4
      %s203 = int_to_ptr.hbm [resolvable:$true] %s202
      %208 = dma.vmem_to_hbm [thread:$0]  %s201, 32, %s203, [#allocation4], 32, 32, 2
    $region29: #{ss_forward.1} parent=1 // pred_fallthru
      _
    // Predicated region
    $region30: #{ss_forward.1} parent=1 // pred_check
      _
    $region31: #{ss_forward.1} parent=1 // pred_check_branch
      %210 = sbr.rel (0) target = $region33
    $region32: #{ss_forward.1} parent=1 // pred_region
      %212 = vsyncadd [#allocation9], 224
      %s213 = sshll.u32 [#allocation8], 4
      %s214 = int_to_ptr.vmem [resolvable:$true] %s213
      %s215 = sshll.u32 %s5, 4
      %s216 = int_to_ptr.hbm [resolvable:$true] %s215
      %221 = dma.vmem_to_hbm [thread:$0]  %s214, 32, %s216, [#allocation9], 32, 32, 2
    $region33: #{ss_forward.1} parent=1 // pred_fallthru
      _
    // Predicated region
    $region34: #{ss_forward.1} parent=1 // pred_check
      _
    $region35: #{ss_forward.1} parent=1 // pred_check_branch
      %223 = sbr.rel (0) target = $region37
    $region36: #{ss_forward.1} parent=1 // pred_region
      %225 = dma.done [#allocation4], 256
    $region37: #{ss_forward.1} parent=1 // pred_fallthru
      _
    // Predicated region
    $region38: #{ss_forward.1} parent=1 // pred_check
      _
    $region39: #{ss_forward.1} parent=1 // pred_check_branch
      %227 = sbr.rel (0) target = $region41
    $region40: #{ss_forward.1} parent=1 // pred_region
      %229 = dma.done [#allocation9], 256
    $region41: #{ss_forward.1} parent=1 // pred_fallthru
      _
    %230 = vsyncpa [#allocation3], 1
    %231 = vsyncpa [#allocation6], 1
    %232 = vsyncpa [#allocation4], 1
    %233 = vsyncpa [#allocation9], 1

</llo_original>
